<compile_context>
chip_gen: v7x
topology: tpu7x:2x2x1
jax: 0.10.0
libtpu: 0.0.40
codegen_flags: <defaults>
</compile_context>

<pallas_src>
import functools

import jax
import jax.numpy as jnp
from jax.experimental import pallas as pl
from jax.experimental.pallas import tpu as pltpu


def _ls_ce_kernel(logits_ref, label_ref, loss_ref, nvalid_ref,
                  *, lb_smooth, ignore_index, hw, tile_hw):
    """One (1, C, tile_hw) logits block: classes on sublanes, pixels on lanes."""
    i = pl.program_id(1)

    @pl.when(i == 0)
    def _():
        loss_ref[...] = jnp.zeros_like(loss_ref)
        nvalid_ref[...] = jnp.zeros_like(nvalid_ref)

    x = logits_ref[0].astype(jnp.float32)            # (C, T)  (matches logits.float())
    lbl = label_ref[0]                               # (1, T) int32
    num_classes = x.shape[0]

    ignore = lbl == ignore_index                     # (1, T)
    lbl_c = jnp.where(ignore, 0, lbl)                # label[ignore] = 0

    # Numerically stable log-softmax pieces over the class (sublane) axis.
    m = jnp.max(x, axis=0, keepdims=True)            # (1, T)
    z = x - m                                        # (C, T)
    lse = jnp.log(jnp.sum(jnp.exp(z), axis=0, keepdims=True))   # (1, T)

    # sum_c logs = sum_c z - C*lse ; logs[label] = z[label] - lse
    sum_z = jnp.sum(z, axis=0, keepdims=True)        # (1, T)
    class_ids = jax.lax.broadcasted_iota(jnp.int32, x.shape, 0)  # (C, T)
    z_at_lbl = jnp.sum(jnp.where(class_ids == lbl_c, z, 0.0),
                       axis=0, keepdims=True)        # (1, T)

    lb_pos = 1.0 - lb_smooth
    lb_neg = lb_smooth / num_classes
    # loss = -sum_c lb_one_hot[c] * logs[c]
    #      = -(lb_neg * sum_c logs + (lb_pos - lb_neg) * logs[label])
    loss = -(lb_neg * (sum_z - num_classes * lse)
             + (lb_pos - lb_neg) * (z_at_lbl - lse))             # (1, T)

    valid = jnp.logical_not(ignore)
    if hw % tile_hw != 0:
        # Ragged tail: out-of-bounds logits/labels are garbage, so the mask is
        # based on the *global pixel index*, never on padded labels.
        pix = jax.lax.broadcasted_iota(jnp.int32, lbl.shape, 1) + i * tile_hw
        valid = jnp.logical_and(valid, pix < hw)

    loss = jnp.where(valid, loss, 0.0)               # loss[ignore] = 0

    loss_ref[...] += jnp.sum(loss)
    nvalid_ref[...] += jnp.sum(valid.astype(jnp.float32))


def _vmem_limit_bytes():
    """Per-chip scoped-VMEM budget: half the physical capacity, capped."""
    try:
        cap = int(pltpu.get_tpu_info().vmem_capacity_bytes)
    except Exception:
        cap = 64 * 1024 * 1024      # conservative fallback (v7x physical VMEM)
    # v5e/v6e -> 64 MiB (well above v5e's 16 MiB default), v7x -> 32 MiB.
    return int(min(cap // 2, 96 * 1024 * 1024))


def _pick_tile_hw(hw, c, itemsize, vmem_limit):
    """Largest lane-aligned pixel tile whose double-buffered block fits VMEM."""
    budget = vmem_limit // 6                 # 2x logits buffers + labels + headroom
    t = budget // max(c * itemsize, 1)
    t = max(128, (t // 128) * 128)           # lane-dim multiple of 128
    t = min(t, 64 * 1024)
    if hw <= t:
        return hw                            # single full-dim block along pixels
    return t


def label_smooth_softmax_ce(logits, label, *, lb_smooth=0.1,
                            reduction='mean', ignore_index=-100,
                            tile_hw=None):
    """logits: (N, C, H, W) float, label: (N, H, W) int."""
    n, c, h, w = logits.shape
    hw = h * w

    # Contiguous reshapes only -- no transpose / pad passes over HBM.
    logits3d = logits.reshape(n, c, hw)
    label3d = label.reshape(n, 1, hw).astype(jnp.int32)

    vmem_limit = _vmem_limit_bytes()
    if tile_hw is None:
        tile_hw = _pick_tile_hw(hw, c, logits3d.dtype.itemsize, vmem_limit)
    tile_hw = min(tile_hw, hw)
    n_hw_blocks = pl.cdiv(hw, tile_hw)

    kernel = functools.partial(_ls_ce_kernel, lb_smooth=lb_smooth,
                               ignore_index=ignore_index, hw=hw,
                               tile_hw=tile_hw)

    total = n * c * hw
    cost = pl.CostEstimate(
        flops=6 * total,
        transcendentals=total + n * hw,             # exp per element + log per pixel
        bytes_accessed=total * logits3d.dtype.itemsize + n * hw * 4 + 8 * n,
    )

    loss_part, nvalid_part = pl.pallas_call(
        kernel,
        out_shape=(jax.ShapeDtypeStruct((n, 1, 1), jnp.float32),
                   jax.ShapeDtypeStruct((n, 1, 1), jnp.float32)),
        grid_spec=pltpu.PrefetchScalarGridSpec(
            num_scalar_prefetch=0,
            grid=(n, n_hw_blocks),
            in_specs=[
                pl.BlockSpec((1, c, tile_hw), lambda b, i: (b, 0, i)),
                pl.BlockSpec((1, 1, tile_hw), lambda b, i: (b, 0, i)),
            ],
            out_specs=[
                pl.BlockSpec((1, 1, 1), lambda b, i: (b, 0, 0)),
                pl.BlockSpec((1, 1, 1), lambda b, i: (b, 0, 0)),
            ],
        ),
        compiler_params=pltpu.CompilerParams(
            dimension_semantics=("parallel", "arbitrary"),
            vmem_limit_bytes=vmem_limit),
        cost_estimate=cost,
    )(logits3d, label3d)

    loss_sum = jnp.sum(loss_part)
    n_valid = jnp.sum(nvalid_part)

    if reduction == 'mean':
        # NOTE: matches PyTorch -- NaN/inf if every label is ignore_index.
        return loss_sum / n_valid
    if reduction == 'sum':
        return loss_sum
    # TODO(synk): reduction='none' needs the per-pixel (N, H, W) loss map written out.
    raise NotImplementedError(reduction)


def _reference(logits, label, *, lb_smooth=0.1, ignore_index=-100,
               reduction='mean'):
    logits = logits.astype(jnp.float32)
    n, c, h, w = logits.shape
    ignore = label == ignore_index
    n_valid = jnp.sum(~ignore)
    lbl = jnp.where(ignore, 0, label)
    lb_pos, lb_neg = 1.0 - lb_smooth, lb_smooth / c
    onehot = jax.nn.one_hot(lbl, c, axis=1, dtype=jnp.float32)
    lb_one_hot = onehot * lb_pos + (1.0 - onehot) * lb_neg
    logs = jax.nn.log_softmax(logits, axis=1)
    loss = -jnp.sum(logs * lb_one_hot, axis=1)
    loss = jnp.where(ignore, 0.0, loss)
    if reduction == 'mean':
        return jnp.sum(loss) / n_valid
    return jnp.sum(loss)


if __name__ == "__main__":
    key = jax.random.PRNGKey(0)
    k1, k2, k3, k4 = jax.random.split(key, 4)

    # Test 1: module-spec shapes, auto tile (single full-width pixel block).
    N, C, H, W = 2, 8, 16, 16
    logits = jax.random.normal(k1, (N, C, H, W), dtype=jnp.float32)
    label = jax.random.randint(k2, (N, H, W), 0, C, dtype=jnp.int32)
    label = label.at[0, 0, :4].set(-100)          # exercise ignore_index masking

    out = label_smooth_softmax_ce(logits, label, lb_smooth=0.1,
                                  reduction='mean', ignore_index=-100)
    out = jax.block_until_ready(out)
    ref = _reference(logits, label, lb_smooth=0.1, ignore_index=-100)
    assert jnp.allclose(out, ref, rtol=2e-5, atol=2e-5), (out, ref)

    # Test 2: ragged pixel tail (HW=400, tile_hw=128) + 'sum' reduction,
    # exercising the in-kernel global-index tail mask (no HBM padding).
    N2, C2, H2, W2 = 2, 8, 20, 20
    logits2 = jax.random.normal(k3, (N2, C2, H2, W2), dtype=jnp.float32)
    label2 = jax.random.randint(k4, (N2, H2, W2), 0, C2, dtype=jnp.int32)
    label2 = label2.at[1, 3, :7].set(-100)

    out2 = label_smooth_softmax_ce(logits2, label2, lb_smooth=0.1,
                                   reduction='sum', ignore_index=-100,
                                   tile_hw=128)
    out2 = jax.block_until_ready(out2)
    ref2 = _reference(logits2, label2, lb_smooth=0.1, ignore_index=-100,
                      reduction='sum')
    assert jnp.allclose(out2, ref2, rtol=2e-5, atol=2e-4), (out2, ref2)

    print("KERNEL_OK")
</pallas_src>

<mosaic_0001>
module attributes {stable_mosaic.version = 11 : i64} {
  func.func @_ls_ce_kernel(%arg0: i32, %arg1: i32, %arg2: memref<1x8x256xf32, #tpu.memory_space<vmem>>, %arg3: memref<1x1x256xi32, #tpu.memory_space<vmem>>, %arg4: memref<1x1x1xf32, #tpu.memory_space<vmem>>, %arg5: memref<1x1x1xf32, #tpu.memory_space<vmem>>) attributes {dimension_semantics = [#tpu.dimension_semantics<parallel>, #tpu.dimension_semantics<arbitrary>], iteration_bounds = array<i64: 2, 1>, scalar_prefetch = 0 : i64, scratch_operands = 0 : i64, tpu.core_type = #tpu.core_type<tc>, window_params = [{transform_indices = @transform_0, window_bounds = array<i64: 1, 8, 256>}, {transform_indices = @transform_1, window_bounds = array<i64: 1, 1, 256>}, {transform_indices = @transform_2, window_bounds = array<i64: 1, 1, 1>}, {transform_indices = @transform_3, window_bounds = array<i64: 1, 1, 1>}]} {
    %c0_i32 = arith.constant 0 : i32
    %0 = arith.cmpi eq, %arg1, %c0_i32 : i32
    %1 = arith.extui %0 : i1 to i32
    %c0_i32_0 = arith.constant 0 : i32
    %2 = arith.cmpi ne, %1, %c0_i32_0 : i32
    scf.if %2 {
      %cst_31 = arith.constant 0.000000e+00 : f32
      %60 = vector.broadcast %cst_31 : f32 to vector<1x1x1xf32>
      %c0_32 = arith.constant 0 : index
      %c0_33 = arith.constant 0 : index
      %c0_34 = arith.constant 0 : index
      %61 = vector.load %arg4[%c0_32, %c0_33, %c0_34] : memref<1x1x1xf32, #tpu.memory_space<vmem>>, vector<1x1x1xf32>
      tpu.vector_store %arg4[%c0_32, %c0_33, %c0_34], %60 {strides = array<i32>} : memref<1x1x1xf32, #tpu.memory_space<vmem>>, vector<1x1x1xf32>,
      %cst_35 = arith.constant 0.000000e+00 : f32
      %62 = vector.broadcast %cst_35 : f32 to vector<1x1x1xf32>
      %c0_36 = arith.constant 0 : index
      %c0_37 = arith.constant 0 : index
      %c0_38 = arith.constant 0 : index
      %63 = vector.load %arg5[%c0_36, %c0_37, %c0_38] : memref<1x1x1xf32, #tpu.memory_space<vmem>>, vector<1x1x1xf32>
      tpu.vector_store %arg5[%c0_36, %c0_37, %c0_38], %62 {strides = array<i32>} : memref<1x1x1xf32, #tpu.memory_space<vmem>>, vector<1x1x1xf32>,
    } else {
    }
    %c0 = arith.constant 0 : index
    %c0_1 = arith.constant 0 : index
    %c0_2 = arith.constant 0 : index
    %3 = vector.load %arg2[%c0, %c0_1, %c0_2] : memref<1x8x256xf32, #tpu.memory_space<vmem>>, vector<1x8x256xf32>
    %4 = vector.shape_cast %3 : vector<1x8x256xf32> to vector<8x256xf32>
    %c0_3 = arith.constant 0 : index
    %c0_4 = arith.constant 0 : index
    %c0_5 = arith.constant 0 : index
    %5 = vector.load %arg3[%c0_3, %c0_4, %c0_5] : memref<1x1x256xi32, #tpu.memory_space<vmem>>, vector<1x1x256xi32>
    %6 = vector.shape_cast %5 : vector<1x1x256xi32> to vector<1x256xi32>
    %c-100_i32 = arith.constant -100 : i32
    %7 = vector.broadcast %c-100_i32 : i32 to vector<1x256xi32>
    %8 = arith.cmpi eq, %6, %7 : vector<1x256xi32>
    %c0_i32_6 = arith.constant 0 : i32
    %9 = vector.broadcast %c0_i32_6 : i32 to vector<1x256xi32>
    %10 = arith.select %8, %9, %6 : vector<1x256xi1>, vector<1x256xi32>
    %cst = arith.constant dense<0xFF800000> : vector<256xf32>
    %11 = vector.multi_reduction <maximumf>, %4, %cst [0] : vector<8x256xf32> to vector<256xf32>
    %12 = vector.shape_cast %11 : vector<256xf32> to vector<1x256xf32>
    %13 = vector.broadcast %12 : vector<1x256xf32> to vector<8x256xf32>
    %14 = arith.subf %4, %13 : vector<8x256xf32>
    %15 = math.exp %14 : vector<8x256xf32>
    %cst_7 = arith.constant dense<0.000000e+00> : vector<256xf32>
    %16 = vector.multi_reduction <add>, %15, %cst_7 [0] : vector<8x256xf32> to vector<256xf32>
    %17 = vector.shape_cast %16 : vector<256xf32> to vector<1x256xf32>
    %18 = math.log %17 : vector<1x256xf32>
    %cst_8 = arith.constant dense<0.000000e+00> : vector<256xf32>
    %19 = vector.multi_reduction <add>, %14, %cst_8 [0] : vector<8x256xf32> to vector<256xf32>
    %20 = vector.shape_cast %19 : vector<256xf32> to vector<1x256xf32>
    %21 = tpu.iota {dimensions = array<i32: 0>} : vector<8x256xi32>
    %22 = vector.broadcast %10 : vector<1x256xi32> to vector<8x256xi32>
    %23 = arith.cmpi eq, %21, %22 : vector<8x256xi32>
    %cst_9 = arith.constant 0.000000e+00 : f32
    %24 = vector.broadcast %cst_9 : f32 to vector<8x256xf32>
    %25 = arith.select %23, %14, %24 : vector<8x256xi1>, vector<8x256xf32>
    %cst_10 = arith.constant dense<0.000000e+00> : vector<256xf32>
    %26 = vector.multi_reduction <add>, %25, %cst_10 [0] : vector<8x256xf32> to vector<256xf32>
    %27 = vector.shape_cast %26 : vector<256xf32> to vector<1x256xf32>
    %cst_11 = arith.constant 8.000000e+00 : f32
    %28 = vector.broadcast %cst_11 : f32 to vector<1x256xf32>
    %29 = arith.mulf %28, %18 : vector<1x256xf32>
    %30 = arith.subf %20, %29 : vector<1x256xf32>
    %cst_12 = arith.constant 1.250000e-02 : f32
    %31 = vector.broadcast %cst_12 : f32 to vector<1x256xf32>
    %32 = arith.mulf %31, %30 : vector<1x256xf32>
    %33 = arith.subf %27, %18 : vector<1x256xf32>
    %cst_13 = arith.constant 0.887499988 : f32
    %34 = vector.broadcast %cst_13 : f32 to vector<1x256xf32>
    %35 = arith.mulf %34, %33 : vector<1x256xf32>
    %36 = arith.addf %32, %35 : vector<1x256xf32>
    %cst_14 = arith.constant 0.000000e+00 : f32
    %37 = vector.broadcast %cst_14 : f32 to vector<1x256xf32>
    %38 = arith.subf %37, %36 : vector<1x256xf32>
    %cst_15 = arith.constant dense<true> : vector<1x256xi1>
    %39 = arith.xori %8, %cst_15 : vector<1x256xi1>
    %cst_16 = arith.constant 0.000000e+00 : f32
    %40 = vector.broadcast %cst_16 : f32 to vector<1x256xf32>
    %41 = arith.select %39, %38, %40 : vector<1x256xi1>, vector<1x256xf32>
    %c0_17 = arith.constant 0 : index
    %c0_18 = arith.constant 0 : index
    %c0_19 = arith.constant 0 : index
    %42 = vector.load %arg4[%c0_17, %c0_18, %c0_19] : memref<1x1x1xf32, #tpu.memory_space<vmem>>, vector<1x1x1xf32>
    %43 = vector.shape_cast %41 : vector<1x256xf32> to vector<1x1x256xf32>
    %cst_20 = arith.constant dense<0.000000e+00> : vector<1xf32>
    %44 = vector.multi_reduction <add>, %43, %cst_20 [1, 2] : vector<1x1x256xf32> to vector<1xf32>
    %45 = vector.shape_cast %44 : vector<1xf32> to vector<1x1x1xf32>
    %46 = vector.extract %45[0, 0, 0] : f32 from vector<1x1x1xf32>
    %47 = vector.broadcast %46 : f32 to vector<1x1x1xf32>
    %48 = arith.addf %42, %47 : vector<1x1x1xf32>
    %c0_21 = arith.constant 0 : index
    %c0_22 = arith.constant 0 : index
    %c0_23 = arith.constant 0 : index
    %49 = vector.load %arg4[%c0_21, %c0_22, %c0_23] : memref<1x1x1xf32, #tpu.memory_space<vmem>>, vector<1x1x1xf32>
    tpu.vector_store %arg4[%c0_21, %c0_22, %c0_23], %48 {strides = array<i32>} : memref<1x1x1xf32, #tpu.memory_space<vmem>>, vector<1x1x1xf32>,
    %c0_24 = arith.constant 0 : index
    %c0_25 = arith.constant 0 : index
    %c0_26 = arith.constant 0 : index
    %50 = vector.load %arg5[%c0_24, %c0_25, %c0_26] : memref<1x1x1xf32, #tpu.memory_space<vmem>>, vector<1x1x1xf32>
    %51 = arith.extui %39 : vector<1x256xi1> to vector<1x256xi32>
    %52 = arith.sitofp %51 : vector<1x256xi32> to vector<1x256xf32>
    %53 = vector.shape_cast %52 : vector<1x256xf32> to vector<1x1x256xf32>
    %cst_27 = arith.constant dense<0.000000e+00> : vector<1xf32>
    %54 = vector.multi_reduction <add>, %53, %cst_27 [1, 2] : vector<1x1x256xf32> to vector<1xf32>
    %55 = vector.shape_cast %54 : vector<1xf32> to vector<1x1x1xf32>
    %56 = vector.extract %55[0, 0, 0] : f32 from vector<1x1x1xf32>
    %57 = vector.broadcast %56 : f32 to vector<1x1x1xf32>
    %58 = arith.addf %50, %57 : vector<1x1x1xf32>
    %c0_28 = arith.constant 0 : index
    %c0_29 = arith.constant 0 : index
    %c0_30 = arith.constant 0 : index
    %59 = vector.load %arg5[%c0_28, %c0_29, %c0_30] : memref<1x1x1xf32, #tpu.memory_space<vmem>>, vector<1x1x1xf32>
    tpu.vector_store %arg5[%c0_28, %c0_29, %c0_30], %58 {strides = array<i32>} : memref<1x1x1xf32, #tpu.memory_space<vmem>>, vector<1x1x1xf32>,
    return
  }
  func.func @transform_0(%arg0: i32, %arg1: i32) -> (i32, i32, i32) {
    %c0_i32 = arith.constant 0 : i32
    %c0_i32_0 = arith.constant 0 : i32
    return %arg0, %c0_i32, %arg1 : i32, i32, i32
  }
  func.func @transform_1(%arg0: i32, %arg1: i32) -> (i32, i32, i32) {
    %c0_i32 = arith.constant 0 : i32
    %c0_i32_0 = arith.constant 0 : i32
    return %arg0, %c0_i32, %arg1 : i32, i32, i32
  }
  func.func @transform_2(%arg0: i32, %arg1: i32) -> (i32, i32, i32) {
    %c0_i32 = arith.constant 0 : i32
    %c0_i32_0 = arith.constant 0 : i32
    %c0_i32_1 = arith.constant 0 : i32
    return %arg0, %c0_i32, %c0_i32_0 : i32, i32, i32
  }
  func.func @transform_3(%arg0: i32, %arg1: i32) -> (i32, i32, i32) {
    %c0_i32 = arith.constant 0 : i32
    %c0_i32_0 = arith.constant 0 : i32
    %c0_i32_1 = arith.constant 0 : i32
    return %arg0, %c0_i32, %c0_i32_0 : i32, i32, i32
  }
}

</mosaic_0001>

<llo_original>
// kernel: tpu_custom_call.1
$region0: #{tpu_custom_call.1}
  #allocation0 [shape = 'u32[]', space=smem, size = 0x4, offset = 0x4, fixed_abs, tag = 'smem constant byte address 0x4 - core index']
  #allocation1 [shape = 'u32[144,128]{1,0:T(1,128)}', space=vmem, size = 0x12000, scoped, tag = 'internal scratch']
  %s0 = inlined_call_operand.hbm [shape: f32[2,8,256], index: 0, kind: input, shape index: {}]
  %s1 = inlined_call_operand.hbm [shape: s32[2,1,256], index: 1, kind: input, shape index: {}]
  %s2 = inlined_call_operand.vmem [shape: f32[2,1,1], index: 2, kind: output, shape index: {0}]
  %s3 = inlined_call_operand.vmem [shape: f32[2,1,1], index: 3, kind: output, shape index: {1}]
  %4 = xla_tuple %s2, %s3
  %s5 = sld [smem:[#allocation0]]
  $region61: #{tpu_custom_call.1} parent=0
    _
  %s7 = ssub.s32 1, %s5
  %s8 = scalar_select 0, %s7, %s5
  $region1: #{tpu_custom_call.1} parent=0
    #allocation2 [shape = 'u8[16384]{0}', space=vmem, size = 0x4000, scoped, tag = 'input window, operand 0']
    #allocation3 [shape = 's32[2]{0}', space=sflag, size = 0x8, scoped, tag = 'scoped memory for tpu_custom_call.1']
    #allocation4 [shape = 'u8[2048]{0}', space=vmem, size = 0x800, scoped, tag = 'input window, operand 1']
    #allocation5 [shape = 's32[2]{0}', space=sflag, size = 0x8, scoped, tag = 'scoped memory for tpu_custom_call.1']
    %9 = vsyncpa [#allocation3], 0
    %s10 = scalar_lea.sflag [#allocation3], 1
    %11 = vsyncpa %s10, 0
    %12 = vsyncpa [#allocation5], 0
    %s13 = scalar_lea.sflag [#allocation5], 1
    %14 = vsyncpa %s13, 0
    loop: start=0, step=1, limit=4
    $region2: #{tpu_custom_call.1} parent=1 // loop_pre_header
      _
    $region3: #{tpu_custom_call.1} parent=1 // loop_header
      %s16 = sphi 0, %s20
      %p17 = scmp.ge.s32.totalorder %s16, 4
      %s23 = sphi 0, %s35
      %s24 = sphi 0, %s31
      %s25 = sphi 0, %s23
      %s26 = sphi 0, %s24
      %s27 = sphi 0, %s25
      %s28 = sphi 0, %s26
      %s40 = sphi 0, %s42
      %s43 = sphi 0, %s40
      %s44 = sphi 0, %s43
      %s60 = sphi 0, %s44
      %s68 = sphi 0, %s70
      %s71 = sphi 0, %s68
      %s72 = sphi 0, %s71
      %s88 = sphi 0, %s72
      %s94 = sphi 0, %s96
      %s97 = sphi 0, %s94
      %s98 = sphi 0, %s97
      %s114 = sphi 0, %s98
      %s120 = sphi 0, %s122
      %s123 = sphi 0, %s120
      %s124 = sphi 0, %s123
      %s140 = sphi 0, %s124
    $region4: #{tpu_custom_call.1} parent=1 // loop_header_branch
      %19 = sbr.rel (%p17) target = $region8
    $region5: #{tpu_custom_call.1} parent=1 // loop_body
      %s21 = ssub.s32 %s16, 1
      %s22 = ssub.s32 %s16, 2
      %s29 = sadd.s32 1, %s24
      %p30 = scmp.ge.s32.totalorder %s29, 1
      %s31 = scalar_select %p30, 0, %s29
      %s32 = sadd.s32 1, %s23
      %s33 = scalar_select %p30, %s32, %s23
      %p34 = scmp.ge.s32.totalorder %s33, 2
      %s35 = scalar_select %p34, 0, %s33
      %s36 = ssub.s32 %s23, %s35
      %s37 = ssub.s32 %s24, %s31
      %s38 = sor.u32 %s36, %s37
      %p39 = scmp.eq.s32.totalorder %s38, 0
      %s41 = sadd.s32 %s40, 1
      %s42 = scalar_select %p39, %s40, %s41
      %p45 = pneg %p39
      %p46 = scmp.eq.s32.totalorder %s16, 1
      %p47 = por %p45, %p46
      %p48 = scmp.ne.s32.totalorder %s40, %s43
      %p49 = scmp.eq.s32.totalorder %s16, 0
      %p50 = por %p48, %p49
      %p51 = scmp.ne.s32.totalorder %s40, %s43
      %p52 = scmp.eq.s32.totalorder %s21, 1
      %p53 = por %p51, %p52
      %p54 = scmp.ne.s32.totalorder %s43, %s44
      %p55 = scmp.eq.s32.totalorder %s21, 0
      %p56 = por %p54, %p55
      %p57 = scmp.ne.s32.totalorder %s43, %s44
      %p58 = scmp.eq.s32.totalorder %s22, 1
      %p59 = por %p57, %p58
      %p61 = scmp.ne.s32.totalorder %s44, %s60
      %p62 = scmp.eq.s32.totalorder %s22, 0
      %p63 = por %p61, %p62
      %s64 = ssub.s32 %s23, %s35
      %s65 = ssub.s32 %s24, %s31
      %s66 = sor.u32 %s64, %s65
      %p67 = scmp.eq.s32.totalorder %s66, 0
      %s69 = sadd.s32 %s68, 1
      %s70 = scalar_select %p67, %s68, %s69
      %p73 = pneg %p67
      %p74 = scmp.eq.s32.totalorder %s16, 1
      %p75 = por %p73, %p74
      %p76 = scmp.ne.s32.totalorder %s68, %s71
      %p77 = scmp.eq.s32.totalorder %s16, 0
      %p78 = por %p76, %p77
      %p79 = scmp.ne.s32.totalorder %s68, %s71
      %p80 = scmp.eq.s32.totalorder %s21, 1
      %p81 = por %p79, %p80
      %p82 = scmp.ne.s32.totalorder %s71, %s72
      %p83 = scmp.eq.s32.totalorder %s21, 0
      %p84 = por %p82, %p83
      %p85 = scmp.ne.s32.totalorder %s71, %s72
      %p86 = scmp.eq.s32.totalorder %s22, 1
      %p87 = por %p85, %p86
      %p89 = scmp.ne.s32.totalorder %s72, %s88
      %p90 = scmp.eq.s32.totalorder %s22, 0
      %p91 = por %p89, %p90
      %s92 = ssub.s32 %s23, %s35
      %p93 = scmp.eq.s32.totalorder %s92, 0
      %s95 = sadd.s32 %s94, 1
      %s96 = scalar_select %p93, %s94, %s95
      %p99 = pneg %p93
      %p100 = scmp.eq.s32.totalorder %s16, 1
      %p101 = por %p99, %p100
      %p102 = scmp.ne.s32.totalorder %s94, %s97
      %p103 = scmp.eq.s32.totalorder %s16, 0
      %p104 = por %p102, %p103
      %p105 = scmp.ne.s32.totalorder %s94, %s97
      %p106 = scmp.eq.s32.totalorder %s21, 1
      %p107 = por %p105, %p106
      %p108 = scmp.ne.s32.totalorder %s97, %s98
      %p109 = scmp.eq.s32.totalorder %s21, 0
      %p110 = por %p108, %p109
      %p111 = scmp.ne.s32.totalorder %s97, %s98
      %p112 = scmp.eq.s32.totalorder %s22, 1
      %p113 = por %p111, %p112
      %p115 = scmp.ne.s32.totalorder %s98, %s114
      %p116 = scmp.eq.s32.totalorder %s22, 0
      %p117 = por %p115, %p116
      %s118 = ssub.s32 %s23, %s35
      %p119 = scmp.eq.s32.totalorder %s118, 0
      %s121 = sadd.s32 %s120, 1
      %s122 = scalar_select %p119, %s120, %s121
      %p125 = pneg %p119
      %p126 = scmp.eq.s32.totalorder %s16, 1
      %p127 = por %p125, %p126
      %p128 = scmp.ne.s32.totalorder %s120, %s123
      %p129 = scmp.eq.s32.totalorder %s16, 0
      %p130 = por %p128, %p129
      %p131 = scmp.ne.s32.totalorder %s120, %s123
      %p132 = scmp.eq.s32.totalorder %s21, 1
      %p133 = por %p131, %p132
      %p134 = scmp.ne.s32.totalorder %s123, %s124
      %p135 = scmp.eq.s32.totalorder %s21, 0
      %p136 = por %p134, %p135
      %p137 = scmp.ne.s32.totalorder %s123, %s124
      %p138 = scmp.eq.s32.totalorder %s22, 1
      %p139 = por %p137, %p138
      %p141 = scmp.ne.s32.totalorder %s124, %s140
      %p142 = scmp.eq.s32.totalorder %s22, 0
      %p143 = por %p141, %p142
      %p144 = scmp.le.s32.totalorder 1, %s16
      %p145 = scmp.lt.s32.totalorder %s16, 3
      %p146 = pnand %p144, %p145
      %p147 = pneg %p146
      // Predicated region
      $region9: #{tpu_custom_call.1} parent=5 // pred_check
        _
      $region10: #{tpu_custom_call.1} parent=5 // pred_check_branch
        %149 = sbr.rel (%p146) target = $region12
      $region11: #{tpu_custom_call.1} parent=5 // pred_region
        %s150 = ssub.s32 %s16, 1
      $region12: #{tpu_custom_call.1} parent=5 // pred_fallthru
        _
      %p151 = scmp.lt.s32.totalorder %s16, 2
      // Predicated region
      $region13: #{tpu_custom_call.1} parent=5 // pred_check
        %p152 = pneg %p151
      $region14: #{tpu_custom_call.1} parent=5 // pred_check_branch
        %154 = sbr.rel (%p152) target = $region16
      $region15: #{tpu_custom_call.1} parent=5 // pred_region
        // Predicated region
        $region17: #{tpu_custom_call.1} parent=15 // pred_check
          %p155 = pneg %p50
        $region18: #{tpu_custom_call.1} parent=15 // pred_check_branch
          %157 = sbr.rel (%p155) target = $region20
        $region19: #{tpu_custom_call.1} parent=15 // pred_region
          %s158 = sand.u32 %s40, 1
          %s159 = scalar_lea.sflag [#allocation3], %s158
          %s160 = sand.u32 %s40, 1
          %s161 = smul.addr %s160, 16
          %s162 = scalar_lea.vmem [#allocation2], %s161
          %s163 = smul.u32 2, %s24
          %s165 = ssub.s32 256, 256
          %166 = vsyncadd %s159, %s165
          %s167 = smul.addr %s23, 2
          %s168 = sadd.s32 %s163, %s167
          %s169 = smul.addr %s168, 128
          %s170 = scalar_lea.hbm %s0, %s169
          %s172 = sshll.u32 %s162, 4
          %s173 = int_to_ptr.vmem [resolvable:$true] %s172
          %175 = dma.hbm_to_vmem [thread:$0]  %s170, 256, %s173, %s159
        $region20: #{tpu_custom_call.1} parent=15 // pred_fallthru
          _
        // Predicated region
        $region21: #{tpu_custom_call.1} parent=15 // pred_check
          %p176 = pneg %p78
        $region22: #{tpu_custom_call.1} parent=15 // pred_check_branch
          %178 = sbr.rel (%p176) target = $region24
        $region23: #{tpu_custom_call.1} parent=15 // pred_region
          %s179 = sand.u32 %s68, 1
          %s180 = scalar_lea.sflag [#allocation5], %s179
          %s181 = sand.u32 %s68, 1
          %s182 = smul.addr %s181, 2
          %s183 = scalar_lea.vmem [#allocation4], %s182
          %s184 = smul.u32 2, %s24
          %s186 = ssub.s32 32, 32
          %187 = vsyncadd %s180, %s186
          %s188 = smul.addr %s23, 2
          %s189 = sadd.s32 %s184, %s188
          %s190 = smul.addr %s189, 16
          %s191 = scalar_lea.hbm %s1, %s190
          %s193 = sshll.u32 %s183, 4
          %s194 = int_to_ptr.vmem [resolvable:$true] %s193
          %196 = dma.hbm_to_vmem [thread:$0]  %s191, 32, %s194, %s180
        $region24: #{tpu_custom_call.1} parent=15 // pred_fallthru
          _
      $region16: #{tpu_custom_call.1} parent=5 // pred_fallthru
        _
      %p197 = scmp.le.s32.totalorder 1, %s16
      %p198 = scmp.lt.s32.totalorder %s16, 3
      %p199 = pnand %p197, %p198
      %p200 = pneg %p199
      // Predicated region
      $region25: #{tpu_custom_call.1} parent=5 // pred_check
        _
      $region26: #{tpu_custom_call.1} parent=5 // pred_check_branch
        %202 = sbr.rel (%p199) target = $region28
      $region27: #{tpu_custom_call.1} parent=5 // pred_region
        %s203 = ssub.s32 %s16, 1
        %s204 = sand.u32 %s43, 1
        %s205 = scalar_lea.sflag [#allocation3], %s204
        %s206 = sand.u32 %s43, 1
        %s207 = smul.addr %s206, 16
        %s208 = scalar_lea.vmem [#allocation2], %s207
        // Predicated region
        $region29: #{tpu_custom_call.1} parent=27 // pred_check
          %p209 = pneg %p56
        $region30: #{tpu_custom_call.1} parent=27 // pred_check_branch
          %211 = sbr.rel (%p209) target = $region32
        $region31: #{tpu_custom_call.1} parent=27 // pred_region
          %212 = dma.done %s205, 256
        $region32: #{tpu_custom_call.1} parent=27 // pred_fallthru
          _
        %s213 = sand.u32 %s71, 1
        %s214 = scalar_lea.sflag [#allocation5], %s213
        %s215 = sand.u32 %s71, 1
        %s216 = smul.addr %s215, 2
        %s217 = scalar_lea.vmem [#allocation4], %s216
        // Predicated region
        $region33: #{tpu_custom_call.1} parent=27 // pred_check
          %p218 = pneg %p84
        $region34: #{tpu_custom_call.1} parent=27 // pred_check_branch
          %220 = sbr.rel (%p218) target = $region36
        $region35: #{tpu_custom_call.1} parent=27 // pred_region
          %221 = dma.done %s214, 32
        $region36: #{tpu_custom_call.1} parent=27 // pred_fallthru
          _
        %s222 = sand.u32 %s43, 1
        %s223 = scalar_lea.sflag [#allocation3], %s222
        %s224 = sand.u32 %s43, 1
        %s225 = smul.addr %s224, 16
        %s226 = scalar_lea.vmem [#allocation2], %s225
        %p227 = pneg %p56
        %p228 = pneg %p53
        %s229 = sand.u32 %s71, 1
        %s230 = scalar_lea.sflag [#allocation5], %s229
        %s231 = sand.u32 %s71, 1
        %s232 = smul.addr %s231, 2
        %s233 = scalar_lea.vmem [#allocation4], %s232
        %p234 = pneg %p84
        %p235 = pneg %p81
        %p236 = pneg %p110
        %p237 = pneg %p107
        %p238 = scmp.lt.s32.totalorder %s25, 1
        %s239 = scalar_select %p238, %s25, 1
        %s240 = scalar_lea.vmem %s2, %s239
        %p241 = pneg %p136
        %p242 = pneg %p133
        %p243 = scmp.lt.s32.totalorder %s25, 1
        %s244 = scalar_select %p243, %s25, 1
        %s245 = scalar_lea.vmem %s3, %s244
        %s246 = smul.u32 2, %s26
        %s247 = smul.u32 2, %s26
        %p248 = scmp.lt.s32.totalorder %s25, 1
        %s249 = scalar_select %p248, %s25, 1
        %s250 = scalar_lea.vmem %s2, %s249
        %p251 = scmp.lt.s32.totalorder %s25, 1
        %s252 = scalar_select %p251, %s25, 1
        %s253 = scalar_lea.vmem %s3, %s252
        %p254 = scmp.eq.s32.totalorder %s26, 0
        // Predicated region
        $region37: #{tpu_custom_call.1} parent=27 // pred_check
          %p255 = pneg %p254
        $region38: #{tpu_custom_call.1} parent=27 // pred_check_branch
          %257 = sbr.rel (%p255) target = $region40
        $region39: #{tpu_custom_call.1} parent=27 // pred_region
          %vm258 = vcmask 0
          %259 = vst.msk [vmem:[%s250] sm:$0x1] %vm258, 0.0
          %260 = vst.msk [vmem:[%s253] sm:$0x1] %vm258, 0.0
        $region40: #{tpu_custom_call.1} parent=27 // pred_fallthru
          _
        %v261 = vld [vmem:[%s208] sm:$0xff]
        %v262 = vld [vmem:[%s208 + $0x8] sm:$0xff]
        %v263 = vld [vmem:[%s217] sm:$0x3]
        %vm264 = vcmp.eq.s32.totalorder %v263, 4294967196
        %v265 = vsel %vm264, 0, %v263
        %v266 = vrot.slane %v261, 4
        %v267 = vmax.f32 %v261, %v266
        %v268 = vrot.slane %v267, 2
        %v269 = vmax.f32 %v267, %v268
        %v270 = vrot.slane %v269, 1
        %v271 = vmax.f32 %v269, %v270
        %v272 = vrot.slane %v262, 4
        %v273 = vmax.f32 %v262, %v272
        %v274 = vrot.slane %v273, 2
        %v275 = vmax.f32 %v273, %v274
        %v276 = vrot.slane %v275, 1
        %v277 = vmax.f32 %v275, %v276
        %v278 = vsub.f32 %v261, %v271
        %v279 = vsub.f32 %v262, %v277
        %v280 = vmul.f32 %v278, 1.442695
        %v281 = vpow.pop %v280
        %v282 = vmul.f32 %v279, 1.442695
        %v283 = vpow.pop %v282
        %v284 = vrot.slane %v281, 4
        %v285 = vadd.f32 %v281, %v284
        %v286 = vrot.slane %v285, 2
        %v287 = vadd.f32 %v285, %v286
        %v288 = vrot.slane %v287, 1
        %v289 = vadd.f32 %v287, %v288
        %v290 = vrot.slane %v283, 4
        %v291 = vadd.f32 %v283, %v290
        %v292 = vrot.slane %v291, 2
        %v293 = vadd.f32 %v291, %v292
        %v294 = vrot.slane %v293, 1
        %v295 = vadd.f32 %v293, %v294
        %v296 = vlog2.pop %v289
        %v297 = vmul.f32 %v296, 0.6931472
        %v298 = vlog2.pop %v295
        %v299 = vmul.f32 %v298, 0.6931472
        %v300 = vrot.slane %v278, 4
        %v301 = vadd.f32 %v278, %v300
        %v302 = vrot.slane %v301, 2
        %v303 = vadd.f32 %v301, %v302
        %v304 = vrot.slane %v303, 1
        %v305 = vadd.f32 %v303, %v304
        %v306 = vrot.slane %v279, 4
        %v307 = vadd.f32 %v279, %v306
        %v308 = vrot.slane %v307, 2
        %v309 = vadd.f32 %v307, %v308
        %v310 = vrot.slane %v309, 1
        %v311 = vadd.f32 %v309, %v310
        %v312 = vlaneseq
        %v313 = vshrl.u32 %v312, 7
        %v314 = vlaneseq
        %v315 = vshrl.u32 %v314, 7
        %v316 = vsub.s32 0, %v315
        %v317 = vrot.slane %v265, %v316
        %v318 = vlaneseq
        %v319 = vshrl.u32 %v318, 7
        %v320 = vsub.s32 1, %v319
        %v321 = vrot.slane %v265, %v320
        %vm322 = vcmp.eq.s32.totalorder %v313, %v317
        %vm323 = vcmp.eq.s32.totalorder %v313, %v321
        %v324 = vsel %vm322, %v278, 0.0
        %v325 = vsel %vm323, %v279, 0.0
        %v326 = vrot.slane %v324, 4
        %v327 = vadd.f32 %v324, %v326
        %v328 = vrot.slane %v327, 2
        %v329 = vadd.f32 %v327, %v328
        %v330 = vrot.slane %v329, 1
        %v331 = vadd.f32 %v329, %v330
        %v332 = vrot.slane %v325, 4
        %v333 = vadd.f32 %v325, %v332
        %v334 = vrot.slane %v333, 2
        %v335 = vadd.f32 %v333, %v334
        %v336 = vrot.slane %v335, 1
        %v337 = vadd.f32 %v335, %v336
        %v338 = vmul.f32 %v297, 8.0
        %v339 = vmul.f32 %v299, 8.0
        %v340 = vsub.f32 %v305, %v338
        %v341 = vsub.f32 %v311, %v339
        %v342 = vmul.f32 %v340, 0.0125
        %v343 = vmul.f32 %v341, 0.0125
        %v344 = vsub.f32 %v331, %v297
        %v345 = vsub.f32 %v337, %v299
        %v346 = vmul.f32 %v344, 0.8875
        %v347 = vmul.f32 %v345, 0.8875
        %v348 = vadd.f32 %v342, %v346
        %v349 = vadd.f32 %v343, %v347
        %v350 = vsub.f32 0.0, %v348
        %v351 = vsub.f32 0.0, %v349
        %vm352 = vmxor %vm264, 1
        %v355 = vcombine.low %v350, %v351
        %v357 = vunpack.c.l.s4 1966171168
        %v358 = vunpack.c.0.s8 %v357
        %v359 = vlaneseq
        %v360 = vshrl.u32 %v359, 7
        %v361 = vsub.s32 %v358, %v360
        %v362 = vrot.slane %v355, %v361
        %v364 = vunpack.c.l.s4 1966171168
        %v365 = vunpack.c.0.s8 %v364
        %v366 = vlaneseq
        %v367 = vshrl.u32 %v366, 7
        %v368 = vsub.s32 %v365, %v367
        %v369 = vrot.slane %v362, %v368
        %v371 = vsel %vm352, %v369, 0.0
        %v372 = vld [vmem:[%s250] sm:$0x1]
        %v374 = vlaneseq
        %v375 = vshrl.u32 %v374, 7
        %v376 = vsub.s32 0, %v375
        %v377 = vrot.slane %v371, %v376
        %v378 = vlaneseq
        %v379 = vshrl.u32 %v378, 7
        %v380 = vsub.s32 1, %v379
        %v381 = vrot.slane %v371, %v380
        %vm384 = vcmask 1040384
        %v385 = vsel %vm384, %v377, 0.0
        %v386 = vsel %vm384, %v381, 0.0
        %v387 = vadd.f32 %v385, %v386
        %388 = vadd.xlane.f32.xlu0 %v387
        %v389 = vpop.xlane.xlu0 %388
        %v390 = vrot.slane %v389, 4
        %v391 = vadd.f32 %v389, %v390
        %v392 = vrot.slane %v391, 2
        %v393 = vadd.f32 %v391, %v392
        %v394 = vrot.slane %v393, 1
        %v395 = vadd.f32 %v393, %v394
        %s396 = vtos %v395
        %v397 = vstv %s396
        %v398 = vadd.f32 %v372, %v397
        %vm399 = vcmask 0
        %400 = vst.msk [vmem:[%s250] sm:$0x1] %vm399, %v398
        %v401 = vld [vmem:[%s253] sm:$0x1]
        %v402 = vsel %vm352, 1, 0
        %v403 = vcvt.s32.f32 %v402
        %v405 = vlaneseq
        %v406 = vshrl.u32 %v405, 7
        %v407 = vsub.s32 0, %v406
        %v408 = vrot.slane %v403, %v407
        %v409 = vlaneseq
        %v410 = vshrl.u32 %v409, 7
        %v411 = vsub.s32 1, %v410
        %v412 = vrot.slane %v403, %v411
        %v415 = vsel %vm384, %v408, 0.0
        %v416 = vsel %vm384, %v412, 0.0
        %v417 = vadd.f32 %v415, %v416
        %418 = vadd.xlane.f32.xlu0 %v417
        %v419 = vpop.xlane.xlu0 %418
        %v420 = vrot.slane %v419, 4
        %v421 = vadd.f32 %v419, %v420
        %v422 = vrot.slane %v421, 2
        %v423 = vadd.f32 %v421, %v422
        %v424 = vrot.slane %v423, 1
        %v425 = vadd.f32 %v423, %v424
        %s426 = vtos %v425
        %v427 = vstv %s426
        %v428 = vadd.f32 %v401, %v427
        %429 = vst.msk [vmem:[%s253] sm:$0x1] %vm399, %v428
        %p430 = scmp.lt.s32.totalorder %s25, 1
        %s431 = scalar_select %p430, %s25, 1
        %s432 = scalar_lea.vmem %s2, %s431
        %p433 = scmp.lt.s32.totalorder %s25, 1
        %s434 = scalar_select %p433, %s25, 1
        %s435 = scalar_lea.vmem %s3, %s434
        // Predicated region
        $region41: #{tpu_custom_call.1} parent=27 // pred_check
          %p436 = pneg %p107
        $region42: #{tpu_custom_call.1} parent=27 // pred_check_branch
          %438 = sbr.rel (%p436) target = $region44
        $region43: #{tpu_custom_call.1} parent=27 // pred_region
          _
        $region44: #{tpu_custom_call.1} parent=27 // pred_fallthru
          _
        // Predicated region
        $region45: #{tpu_custom_call.1} parent=27 // pred_check
          %p439 = pneg %p133
        $region46: #{tpu_custom_call.1} parent=27 // pred_check_branch
          %441 = sbr.rel (%p439) target = $region48
        $region47: #{tpu_custom_call.1} parent=27 // pred_region
          _
        $region48: #{tpu_custom_call.1} parent=27 // pred_fallthru
          _
      $region28: #{tpu_custom_call.1} parent=5 // pred_fallthru
        _
      %p442 = scmp.le.s32.totalorder 2, %s16
      // Predicated region
      $region49: #{tpu_custom_call.1} parent=5 // pred_check
        %p443 = pneg %p442
      $region50: #{tpu_custom_call.1} parent=5 // pred_check_branch
        %445 = sbr.rel (%p443) target = $region52
      $region51: #{tpu_custom_call.1} parent=5 // pred_region
        %s446 = ssub.s32 %s16, 2
        // Predicated region
        $region53: #{tpu_custom_call.1} parent=51 // pred_check
          %p447 = pneg %p113
        $region54: #{tpu_custom_call.1} parent=51 // pred_check_branch
          %449 = sbr.rel (%p447) target = $region56
        $region55: #{tpu_custom_call.1} parent=51 // pred_region
          %p450 = scmp.lt.s32.totalorder %s27, 1
          %s451 = scalar_select %p450, %s27, 1
          %s452 = scalar_lea.vmem %s2, %s451
        $region56: #{tpu_custom_call.1} parent=51 // pred_fallthru
          _
        // Predicated region
        $region57: #{tpu_custom_call.1} parent=51 // pred_check
          %p453 = pneg %p139
        $region58: #{tpu_custom_call.1} parent=51 // pred_check_branch
          %455 = sbr.rel (%p453) target = $region60
        $region59: #{tpu_custom_call.1} parent=51 // pred_region
          %p456 = scmp.lt.s32.totalorder %s27, 1
          %s457 = scalar_select %p456, %s27, 1
          %s458 = scalar_lea.vmem %s3, %s457
        $region60: #{tpu_custom_call.1} parent=51 // pred_fallthru
          _
      $region52: #{tpu_custom_call.1} parent=5 // pred_fallthru
        _
    $region6: #{tpu_custom_call.1} parent=1 // loop_footer
      %s20 = sadd.s32 1, %s16
    $region7: #{tpu_custom_call.1} parent=1 // loop_footer_branch
      %15 = sbr.rel target = $region3
    $region8: #{tpu_custom_call.1} parent=1 // loop_exit
      _
    %459 = vsyncpa [#allocation3], 1
    %s460 = scalar_lea.sflag [#allocation3], 1
    %461 = vsyncpa %s460, 1
    %462 = vsyncpa [#allocation5], 1
    %s463 = scalar_lea.sflag [#allocation5], 1
    %464 = vsyncpa %s463, 1

</llo_original>
